<compile_context>
chip_gen: v6e
topology: v6e:2x2x1
jax: 0.10.0
libtpu: 0.0.40
codegen_flags: <defaults>
</compile_context>

<pallas_src>
import functools

import jax
import jax.numpy as jnp
from jax.experimental import pallas as pl
from jax.experimental.pallas import tpu as pltpu

_LANE = 128
_SUB = 8
_ROW_ALIGN = 32        # unmasked stores for f32 / bf16 / int8 sublane packings
_MIN_STEPS = 8         # enough grid steps for pipelining + v7x 2-TC balance
_MiB = 1024 * 1024


def _round_up(a, b):
    return -(-a // b) * b


def _lcq_kernel(params_ref, x_ref, o_ref, *, dequantize, out_clamp):
    # params_ref: (2,) f32 in SMEM = [clip_val, scale]
    # x_ref / o_ref: (block_rows, width) VMEM tiles.
    clip = params_ref[0]
    scale = params_ref[1]

    # Compute in f32 regardless of input dtype (v5e has no bf16 VPU); cast on store.
    x = x_ref[...].astype(jnp.float32)
    y = jnp.minimum(jnp.maximum(x, 0.0), clip)      # relu + learned clipping
    q = jnp.round(scale * y)                        # linear_quantize (zero_point == 0)
    if dequantize:
        q = q / scale                               # linear_dequantize (bit-exact divide)
    if out_clamp is not None:                       # integer output: avoid wraparound
        q = jnp.clip(q, out_clamp[0], out_clamp[1])
    o_ref[...] = q.astype(o_ref.dtype)


def _choose_width(n_main):
    """Widest lane-dense last dim dividing n_main (n_main is a multiple of 128)."""
    widths = (2048, 1024, 512, 256, 128)
    for align in (_ROW_ALIGN, _SUB, 1):
        for w in widths:
            if n_main % (w * align) == 0:
                return w
    return _LANE


def _vmem_capacity_bytes():
    try:
        return int(pltpu.get_tpu_info().vmem_capacity_bytes)
    except Exception:
        return 64 * _MiB      # conservative fallback (v7x per-TC capacity)


def _choose_block_rows(rows, width, in_itemsize, out_itemsize):
    # Budget the double-buffered (in + out) pipeline to <= half of physical VMEM,
    # capped at 48 MiB: v5e/v6e (128 MiB) get ~12 MiB input blocks, v7x (64 MiB) ~8 MiB.
    pipeline_budget = min(_vmem_capacity_bytes() // 2, 48 * _MiB)
    block_pair_bytes = pipeline_budget // 2                    # one (in + out) block pair
    row_bytes = width * (in_itemsize + out_itemsize)
    by_budget = max(_ROW_ALIGN, (block_pair_bytes // row_bytes) // _ROW_ALIGN * _ROW_ALIGN)
    # Keep >= ~_MIN_STEPS grid steps so DMA-in/compute/DMA-out overlap and both v7x
    # TensorCores get balanced work.
    by_steps = _round_up(max(1, pl.cdiv(rows, _MIN_STEPS)), _ROW_ALIGN)
    rows_cap = _round_up(rows, _ROW_ALIGN)
    return max(_ROW_ALIGN, min(by_budget, by_steps, rows_cap))


def _quant_math_jnp(x, clip, scale, dequantize, out_dtype, out_clamp):
    """Plain-jnp path for the (<128 element) ragged tail / degenerate tiny inputs."""
    y = jnp.minimum(jnp.maximum(x.astype(jnp.float32), 0.0), clip)
    q = jnp.round(scale * y)
    if dequantize:
        q = q / scale
    if out_clamp is not None:
        q = jnp.clip(q, out_clamp[0], out_clamp[1])
    return q.astype(out_dtype)


def learned_clipped_linear_quantization(x, clip_val, *, a_bits=8, dequantize=True,
                                        full_pretrain=False, quantized_out_dtype=None,
                                        donate_input=False):
    """Pallas implementation of LearnedClippedLinearQuantization.forward.

    `quantized_out_dtype` (opt-in, quantize-only path) lets dequantize=False store e.g.
    jnp.uint8 to cut output HBM traffic 4x; default keeps the input dtype to match the
    PyTorch module exactly.  `donate_input` aliases the input slab to the output when
    dtypes match (halves HBM footprint; no bandwidth change).
    """
    if full_pretrain:
        # Matches PyTorch: a_bits=32 -> n = 2**32-1 exceeds the f32 mantissa, so the
        # round-trip is a slightly lossy near-identity (same as the torch f32 behavior).
        a_bits = 32
    orig_shape = x.shape
    out_dtype = jnp.dtype(x.dtype)
    if not dequantize and quantized_out_dtype is not None:
        out_dtype = jnp.dtype(quantized_out_dtype)
    out_clamp = None
    if jnp.issubdtype(out_dtype, jnp.integer):
        info = jnp.iinfo(out_dtype)
        out_clamp = (float(info.min), float(info.max))

    # asymmetric_linear_quantization_params(a_bits, 0, clip, signed=False)
    # -> zero_point == 0 here.  Scalar work, done once outside the kernel.
    clip = jnp.asarray(clip_val, jnp.float32).reshape(())
    n = jnp.float32(2 ** a_bits - 1)
    sat_max = jnp.maximum(clip, 0.0)
    diff = jnp.where(sat_max == 0.0, n, sat_max)     # sat_min == 0 -> diff = sat_max
    scale = n / diff
    params = jnp.stack([clip, scale]).astype(jnp.float32)

    flat = x.reshape(-1)
    n_elem = flat.shape[0]
    tail = n_elem % _LANE
    n_main = n_elem - tail

    if n_main == 0:
        # Degenerate tiny input (< 128 elements): not worth a kernel launch.
        return _quant_math_jnp(flat, clip, scale, dequantize, out_dtype,
                               out_clamp).reshape(orig_shape)

    width = _choose_width(n_main)
    x2 = flat[:n_main].reshape(-1, width)            # lane-dense 2-D slab (no pad copy)
    rows = x2.shape[0]
    in_itemsize = x2.dtype.itemsize
    block_rows = _choose_block_rows(rows, width, in_itemsize, out_dtype.itemsize)
    grid = (pl.cdiv(rows, block_rows),)              # ragged last block handled by Pallas

    block_pair_bytes = block_rows * width * (in_itemsize + out_dtype.itemsize)
    vmem_limit = int(min(_vmem_capacity_bytes(),
                         max(2 * block_pair_bytes + 8 * _MiB, 24 * _MiB)))

    io_aliases = {}
    if donate_input and out_dtype == x2.dtype:
        io_aliases = {1: 0}                          # alias x slab -> output slab

    kernel = functools.partial(_lcq_kernel, dequantize=dequantize, out_clamp=out_clamp)
    out2 = pl.pallas_call(
        kernel,
        out_shape=jax.ShapeDtypeStruct(x2.shape, out_dtype),
        grid=grid,
        in_specs=[
            pl.BlockSpec(memory_space=pltpu.SMEM),                 # [clip, scale]
            pl.BlockSpec((block_rows, width), lambda i: (i, 0)),   # x slab tile
        ],
        out_specs=pl.BlockSpec((block_rows, width), lambda i: (i, 0)),
        input_output_aliases=io_aliases,
        compiler_params=pltpu.CompilerParams(
            dimension_semantics=("parallel",),       # lets v7x shard blocks across 2 TCs
            vmem_limit_bytes=vmem_limit),
    )(params, x2)

    if tail:
        # (<128 element) tail in plain jnp; avoids the former pad + post-slice passes.
        tail_out = _quant_math_jnp(flat[n_main:], clip, scale, dequantize, out_dtype,
                                   out_clamp)
        return jnp.concatenate([out2.reshape(-1), tail_out]).reshape(orig_shape)
    return out2.reshape(orig_shape)


def _reference(x, clip_val, a_bits=8, dequantize=True):
    """Pure-JAX reference matching the PyTorch forward."""
    clip = jnp.asarray(clip_val, jnp.float32)
    y = jnp.maximum(x.astype(jnp.float32), 0.0)
    y = jnp.where(y < clip, y, clip)
    n = float(2 ** a_bits - 1)
    sat_max = jnp.maximum(clip, 0.0)
    diff = jnp.where(sat_max == 0.0, n, sat_max)
    scale = n / diff
    q = jnp.round(scale * y)
    out = q / scale if dequantize else q
    return out.astype(x.dtype)


if __name__ == "__main__":
    # Deterministic parameter init (module __init__: clip_val = Tensor([8.0])).
    init_act_clip_val = 8.0
    a_bits = 4

    key = jax.random.PRNGKey(0)
    k1, k2 = jax.random.split(key)

    # Main test: NCHW input; includes negatives and values above clip_val.
    x = jax.random.normal(k1, (2, 4, 16, 16), dtype=jnp.float32) * 5.0
    out = learned_clipped_linear_quantization(
        x, init_act_clip_val, a_bits=a_bits, dequantize=True)
    out = jax.block_until_ready(out)
    ref = _reference(x, init_act_clip_val, a_bits=a_bits, dequantize=True)
    assert out.shape == x.shape and out.dtype == x.dtype
    assert jnp.allclose(out, ref, atol=1e-5, rtol=1e-5)

    # Ragged (prefix + jnp tail) path + quantize-only (dequantize=False) path.
    x2 = jax.random.normal(k2, (2, 3, 5, 7), dtype=jnp.float32) * 5.0
    out_q = learned_clipped_linear_quantization(
        x2, init_act_clip_val, a_bits=a_bits, dequantize=False)
    out_q = jax.block_until_ready(out_q)
    ref_q = _reference(x2, init_act_clip_val, a_bits=a_bits, dequantize=False)
    assert out_q.shape == x2.shape and out_q.dtype == x2.dtype
    assert jnp.allclose(out_q, ref_q, atol=1e-5, rtol=1e-5)

    print("KERNEL_OK")
</pallas_src>

<mosaic_0001>
module attributes {stable_mosaic.version = 11 : i64} {
  func.func @_lcq_kernel(%arg0: i32, %arg1: memref<2xf32, #tpu.memory_space<smem>>, %arg2: memref<32x256xf32, #tpu.memory_space<vmem>>, %arg3: memref<32x256xf32, #tpu.memory_space<vmem>>) attributes {dimension_semantics = [#tpu.dimension_semantics<parallel>], iteration_bounds = array<i64: 1>, scalar_prefetch = 0 : i64, scratch_operands = 0 : i64, tpu.core_type = #tpu.core_type<tc>, window_params = [{transform_indices = @transform_0, window_bounds = array<i64: 2>}, {transform_indices = @transform_1, window_bounds = array<i64: 32, 256>}, {transform_indices = @transform_2, window_bounds = array<i64: 32, 256>}]} {
    %c0 = arith.constant 0 : index
    %0 = memref.load %arg1[%c0] : memref<2xf32, #tpu.memory_space<smem>>
    %c1 = arith.constant 1 : index
    %1 = memref.load %arg1[%c1] : memref<2xf32, #tpu.memory_space<smem>>
    %c0_0 = arith.constant 0 : index
    %c0_1 = arith.constant 0 : index
    %2 = vector.load %arg2[%c0_0, %c0_1] : memref<32x256xf32, #tpu.memory_space<vmem>>, vector<32x256xf32>
    %cst = arith.constant 0.000000e+00 : f32
    %3 = vector.broadcast %cst : f32 to vector<32x256xf32>
    %4 = arith.maximumf %2, %3 : vector<32x256xf32>
    %5 = vector.broadcast %0 : f32 to vector<32x256xf32>
    %6 = arith.minimumf %4, %5 : vector<32x256xf32>
    %7 = vector.broadcast %1 : f32 to vector<32x256xf32>
    %8 = arith.mulf %7, %6 : vector<32x256xf32>
    %9 = math.roundeven %8 : vector<32x256xf32>
    %10 = vector.broadcast %1 : f32 to vector<32x256xf32>
    %11 = arith.divf %9, %10 : vector<32x256xf32>
    %c0_2 = arith.constant 0 : index
    %c0_3 = arith.constant 0 : index
    %12 = vector.load %arg3[%c0_2, %c0_3] : memref<32x256xf32, #tpu.memory_space<vmem>>, vector<32x256xf32>
    tpu.vector_store %arg3[%c0_2, %c0_3], %11 {strides = array<i32>} : memref<32x256xf32, #tpu.memory_space<vmem>>, vector<32x256xf32>,
    return
  }
  func.func @transform_0(%arg0: i32) -> i32 {
    %c0_i32 = arith.constant 0 : i32
    %c0_i32_0 = arith.constant 0 : i32
    return %c0_i32 : i32
  }
  func.func @transform_1(%arg0: i32) -> (i32, i32) {
    %c0_i32 = arith.constant 0 : i32
    %c0_i32_0 = arith.constant 0 : i32
    return %arg0, %c0_i32 : i32, i32
  }
  func.func @transform_2(%arg0: i32) -> (i32, i32) {
    %c0_i32 = arith.constant 0 : i32
    %c0_i32_0 = arith.constant 0 : i32
    return %arg0, %c0_i32 : i32, i32
  }
}

</mosaic_0001>

<llo_original>
// kernel: tpu_custom_call.1
$region0: #{tpu_custom_call.1}
  #allocation0 [shape = 'u32[]', space=smem, size = 0x4, offset = 0x4, fixed_abs, tag = 'smem constant byte address 0x4 - core index']
  #allocation1 [shape = 'u32[144,128]{1,0:T(1,128)}', space=vmem, size = 0x12000, scoped, tag = 'internal scratch']
  %s0 = inlined_call_operand.hbm [shape: f32[2], index: 0, kind: input, shape index: {}]
  %s1 = inlined_call_operand.hbm [shape: f32[8,256], index: 1, kind: input, shape index: {}]
  %s2 = inlined_call_operand.hbm [shape: f32[8,256], index: 2, kind: output, shape index: {}]
  %s3 = sld [smem:[#allocation0]]
  $region26: #{tpu_custom_call.1} parent=0
    _
  %s5 = ssub.s32 1, %s3
  %s6 = scalar_select 0, %s5, %s3
  $region1: #{tpu_custom_call.1} parent=0
    #allocation2 [shape = 'u8[512]{0}', space=smem, size = 0x200, scoped, tag = 'input window, operand 0, single buffered']
    #allocation3 [shape = 's32[1]{0}', space=sflag, size = 0x4, scoped, tag = 'scoped memory for tpu_custom_call.1']
    #allocation4 [shape = 's32[1]{0}', space=sflag, size = 0x4, scoped, tag = 'scoped memory for tpu_custom_call.1']
    #allocation5 [shape = 's32[1]{0}', space=sflag, size = 0x4, scoped, tag = 'scoped memory for tpu_custom_call.1']
    #allocation6 [shape = 'u8[32768]{0}', space=vmem, size = 0x8000, scoped, tag = 'input window, operand 1, single buffered']
    #allocation7 [shape = 'u8[32768]{0}', space=vmem, size = 0x8000, scoped, tag = 'output window, operand 0, single buffered']
    %7 = vsyncpa [#allocation5], 0
    %8 = vsyncpa [#allocation3], 0
    %9 = vsyncpa [#allocation4], 0
    // Predicated region
    $region2: #{tpu_custom_call.1} parent=1 // pred_check
      _
    $region3: #{tpu_custom_call.1} parent=1 // pred_check_branch
      %11 = sbr.rel (0) target = $region5
    $region4: #{tpu_custom_call.1} parent=1 // pred_region
      %s13 = ssub.s32 16, 16
      %14 = vsyncadd [#allocation5], %s13
      %17 = dma.hbm_to_smem %s0, 16, [#allocation2], [#allocation5]
    $region5: #{tpu_custom_call.1} parent=1 // pred_fallthru
      _
    // Predicated region
    $region6: #{tpu_custom_call.1} parent=1 // pred_check
      _
    $region7: #{tpu_custom_call.1} parent=1 // pred_check_branch
      %19 = sbr.rel (0) target = $region9
    $region8: #{tpu_custom_call.1} parent=1 // pred_region
      %s21 = ssub.s32 1024, 256
      %22 = vsyncadd [#allocation3], %s21
      %s23 = sshll.u32 [#allocation6], 4
      %s24 = int_to_ptr.vmem [resolvable:$true] %s23
      %29 = dma.hbm_to_vmem [thread:$0]  %s1, 256, %s24, [#allocation3], 256, 256, 16
    $region9: #{tpu_custom_call.1} parent=1 // pred_fallthru
      _
    // Predicated region
    $region10: #{tpu_custom_call.1} parent=1 // pred_check
      _
    $region11: #{tpu_custom_call.1} parent=1 // pred_check_branch
      %31 = sbr.rel (0) target = $region13
    $region12: #{tpu_custom_call.1} parent=1 // pred_region
      %32 = dma.done [#allocation5], 16
    $region13: #{tpu_custom_call.1} parent=1 // pred_fallthru
      _
    // Predicated region
    $region14: #{tpu_custom_call.1} parent=1 // pred_check
      _
    $region15: #{tpu_custom_call.1} parent=1 // pred_check_branch
      %34 = sbr.rel (0) target = $region17
    $region16: #{tpu_custom_call.1} parent=1 // pred_region
      %35 = dma.done [#allocation3], 1024
    $region17: #{tpu_custom_call.1} parent=1 // pred_fallthru
      _
    %36 = sfence
    %s37 = sld [smem:[#allocation2]]
    %s38 = sld [smem:[#allocation2 + $0x1]]
    %v39 = vld [vmem:[#allocation6] sm:$0xff]
    %v40 = vld [vmem:[#allocation6 + $0x8] sm:$0xff]
    %v41 = vld [vmem:[#allocation6 + $0x10] sm:$0xff]
    %v42 = vld [vmem:[#allocation6 + $0x18] sm:$0xff]
    %v43 = vld [vmem:[#allocation6 + $0x20] sm:$0xff]
    %v44 = vld [vmem:[#allocation6 + $0x28] sm:$0xff]
    %v45 = vld [vmem:[#allocation6 + $0x30] sm:$0xff]
    %v46 = vld [vmem:[#allocation6 + $0x38] sm:$0xff]
    %v47 = vmax.f32 %v39, 0.0
    %v48 = vmax.f32 %v40, 0.0
    %v49 = vmax.f32 %v41, 0.0
    %v50 = vmax.f32 %v42, 0.0
    %v51 = vmax.f32 %v43, 0.0
    %v52 = vmax.f32 %v44, 0.0
    %v53 = vmax.f32 %v45, 0.0
    %v54 = vmax.f32 %v46, 0.0
    %v55 = vstv %s37
    %v56 = vmin.f32 %v47, %v55
    %v57 = vmin.f32 %v48, %v55
    %v58 = vmin.f32 %v49, %v55
    %v59 = vmin.f32 %v50, %v55
    %v60 = vmin.f32 %v51, %v55
    %v61 = vmin.f32 %v52, %v55
    %v62 = vmin.f32 %v53, %v55
    %v63 = vmin.f32 %v54, %v55
    %v64 = vstv %s38
    %v65 = vmul.f32 %v64, %v56
    %v66 = vmul.f32 %v64, %v57
    %v67 = vmul.f32 %v64, %v58
    %v68 = vmul.f32 %v64, %v59
    %v69 = vmul.f32 %v64, %v60
    %v70 = vmul.f32 %v64, %v61
    %v71 = vmul.f32 %v64, %v62
    %v72 = vmul.f32 %v64, %v63
    %v73 = vround.ne.pseudo %v65
    %v74 = vround.ne.pseudo %v66
    %v75 = vround.ne.pseudo %v67
    %v76 = vround.ne.pseudo %v68
    %v77 = vround.ne.pseudo %v69
    %v78 = vround.ne.pseudo %v70
    %v79 = vround.ne.pseudo %v71
    %v80 = vround.ne.pseudo %v72
    %v81 = vrcp.pop %v64
    %v82 = vmul.f32 %v73, %v81
    %v83 = vmul.f32 %v74, %v81
    %v84 = vmul.f32 %v75, %v81
    %v85 = vmul.f32 %v76, %v81
    %v86 = vmul.f32 %v77, %v81
    %v87 = vmul.f32 %v78, %v81
    %v88 = vmul.f32 %v79, %v81
    %v89 = vmul.f32 %v80, %v81
    %90 = vst [vmem:[#allocation7] sm:$0xff] %v82
    %91 = vst [vmem:[#allocation7 + $0x8] sm:$0xff] %v83
    %92 = vst [vmem:[#allocation7 + $0x10] sm:$0xff] %v84
    %93 = vst [vmem:[#allocation7 + $0x18] sm:$0xff] %v85
    %94 = vst [vmem:[#allocation7 + $0x20] sm:$0xff] %v86
    %95 = vst [vmem:[#allocation7 + $0x28] sm:$0xff] %v87
    %96 = vst [vmem:[#allocation7 + $0x30] sm:$0xff] %v88
    %97 = vst [vmem:[#allocation7 + $0x38] sm:$0xff] %v89
    // Predicated region
    $region18: #{tpu_custom_call.1} parent=1 // pred_check
      _
    $region19: #{tpu_custom_call.1} parent=1 // pred_check_branch
      %99 = sbr.rel (0) target = $region21
    $region20: #{tpu_custom_call.1} parent=1 // pred_region
      %s101 = ssub.s32 1024, 256
      %102 = vsyncadd [#allocation4], %s101
      %s103 = sshll.u32 [#allocation7], 4
      %s104 = int_to_ptr.vmem [resolvable:$true] %s103
      %109 = dma.vmem_to_hbm [thread:$0]  %s104, 256, %s2, [#allocation4], 256, 256, 16
    $region21: #{tpu_custom_call.1} parent=1 // pred_fallthru
      _
    // Predicated region
    $region22: #{tpu_custom_call.1} parent=1 // pred_check
      _
    $region23: #{tpu_custom_call.1} parent=1 // pred_check_branch
      %111 = sbr.rel (0) target = $region25
    $region24: #{tpu_custom_call.1} parent=1 // pred_region
      %112 = dma.done [#allocation4], 1024
    $region25: #{tpu_custom_call.1} parent=1 // pred_fallthru
      _
    %113 = vsyncpa [#allocation3], 1
    %114 = vsyncpa [#allocation4], 1
    %115 = vsyncpa [#allocation5], 1

</llo_original>
